<compile_context>
chip_gen: v7x
topology: tpu7x:2x2x1
jax: 0.10.0
libtpu: 0.0.40
codegen_flags: <defaults>
</compile_context>

<pallas_src>
import jax
import jax.numpy as jnp
from jax.experimental import pallas as pl
from jax.experimental.pallas import tpu as pltpu


def downsample_kernel(xcol_ref, w_ref, b_ref, o_ref):
    # xcol_ref: (1, 9C, TS)  w_ref: (C, 9C)  b_ref: (C, 1)  o_ref: (1, C, TS)
    xc = xcol_ref[0]
    w = w_ref[...]
    # bf16 matmul inputs, f32 accumulation on the MXU.
    acc = jnp.dot(w.astype(jnp.bfloat16), xc.astype(jnp.bfloat16),
                  preferred_element_type=jnp.float32)
    o_ref[0] = (acc + b_ref[...]).astype(o_ref.dtype)


def _pick_spatial_tile(s):
    # Largest tile <= 512 that is a multiple of 128 and divides S; otherwise
    # use the full extent (allowed when the block dim equals the array dim).
    for cand in (512, 384, 256, 128):
        if s % cand == 0:
            return cand
    return s


def downsample(x, weight, bias):
    """x: (B, C, H, W) f32, weight: (C, C, 3, 3), bias: (C,)."""
    b, c, h, w = x.shape
    hp, wp = h + 1, w + 1                  # asymmetric pad: bottom/right by 1
    oh = (hp - 3) // 2 + 1
    ow = (wp - 3) // 2 + 1
    s = oh * ow

    xp = jnp.pad(x, ((0, 0), (0, 0), (0, 1), (0, 1)))

    # im2col with stride 2: taps ordered (c_in, kh, kw) to match weight.reshape.
    taps = []
    for kh in range(3):
        for kw in range(3):
            taps.append(jax.lax.slice(
                xp, (0, 0, kh, kw),
                (b, c, kh + 2 * (oh - 1) + 1, kw + 2 * (ow - 1) + 1),
                (1, 1, 2, 2)))
    xcol = jnp.stack(taps, axis=2).reshape(b, c * 9, s)      # (B, 9C, S)

    wmat = weight.reshape(c, c * 9)                           # (C_out, 9*C_in)
    bcol = bias.reshape(c, 1)

    ts = _pick_spatial_tile(s)
    grid = (b, s // ts)

    # VMEM budget: double-buffered xcol + out blocks plus the (small) weights,
    # with headroom; capped well under v7x's 64 MiB physical VMEM.
    block_bytes = 4 * (c * 9 * ts + c * ts)
    vmem_limit = min(max(4 * block_bytes + 4 * (c * 9 * c + c) + (1 << 20),
                         8 * 1024 * 1024),
                     48 * 1024 * 1024)

    out = pl.pallas_call(
        downsample_kernel,
        out_shape=jax.ShapeDtypeStruct((b, c, s), jnp.float32),
        grid=grid,
        in_specs=[
            pl.BlockSpec((1, c * 9, ts), lambda i, j: (i, 0, j)),   # xcol
            pl.BlockSpec((c, c * 9), lambda i, j: (0, 0)),          # weight
            pl.BlockSpec((c, 1), lambda i, j: (0, 0)),              # bias
        ],
        out_specs=pl.BlockSpec((1, c, ts), lambda i, j: (i, 0, j)),
        compiler_params=pltpu.CompilerParams(
            dimension_semantics=("parallel", "parallel"),
            vmem_limit_bytes=vmem_limit),
    )(xcol, wmat, bcol)

    return out.reshape(b, c, oh, ow)


def init_params(key, c):
    """PyTorch Conv2d-style init: U(-lim, lim), lim = 1/sqrt(C*3*3)."""
    k1, k2 = jax.random.split(key)
    lim = 1.0 / jnp.sqrt(jnp.float32(c * 9))
    weight = jax.random.uniform(k1, (c, c, 3, 3), jnp.float32, -lim, lim)
    bias = jax.random.uniform(k2, (c,), jnp.float32, -lim, lim)
    return weight, bias


def ref_forward(x, weight, bias):
    """Pure-JAX reference mirroring the PyTorch forward."""
    y = jax.lax.conv_general_dilated(
        x, weight, window_strides=(2, 2), padding=((0, 1), (0, 1)),
        dimension_numbers=('NCHW', 'OIHW', 'NCHW'))
    return y + bias.reshape(1, -1, 1, 1)


if __name__ == "__main__":
    key = jax.random.PRNGKey(0)
    kx, kp = jax.random.split(key)

    B, C, H, W = 2, 4, 16, 16
    x = jax.random.normal(kx, (B, C, H, W), jnp.float32)
    weight, bias = init_params(kp, C)

    y = jax.block_until_ready(downsample(x, weight, bias))
    y_ref = jax.block_until_ready(ref_forward(x, weight, bias))

    assert y.shape == (B, C, (H - 2) // 2 + 1, (W - 2) // 2 + 1)
    err = float(jnp.max(jnp.abs(y - y_ref)))
    # bf16 matmul inputs with f32 accumulation -> ~1e-2 scale error budget
    assert jnp.allclose(y, y_ref, atol=2e-2, rtol=2e-2), err

    print("KERNEL_OK")
</pallas_src>

<mosaic_0001>
module attributes {stable_mosaic.version = 11 : i64} {
  func.func @downsample_kernel(%arg0: i32, %arg1: i32, %arg2: memref<1x36x64xf32, #tpu.memory_space<vmem>>, %arg3: memref<4x36xf32, #tpu.memory_space<vmem>>, %arg4: memref<4x1xf32, #tpu.memory_space<vmem>>, %arg5: memref<1x4x64xf32, #tpu.memory_space<vmem>>) attributes {dimension_semantics = [#tpu.dimension_semantics<parallel>, #tpu.dimension_semantics<parallel>], iteration_bounds = array<i64: 2, 1>, scalar_prefetch = 0 : i64, scratch_operands = 0 : i64, tpu.core_type = #tpu.core_type<tc>, window_params = [{transform_indices = @transform_0, window_bounds = array<i64: 1, 36, 64>}, {pipeline_mode = #tpu.pipeline_mode<synchronous>, transform_indices = @transform_1, window_bounds = array<i64: 4, 36>}, {pipeline_mode = #tpu.pipeline_mode<synchronous>, transform_indices = @transform_2, window_bounds = array<i64: 4, 1>}, {transform_indices = @transform_3, window_bounds = array<i64: 1, 4, 64>}]} {
    %c0 = arith.constant 0 : index
    %c0_0 = arith.constant 0 : index
    %c0_1 = arith.constant 0 : index
    %0 = vector.load %arg2[%c0, %c0_0, %c0_1] : memref<1x36x64xf32, #tpu.memory_space<vmem>>, vector<1x36x64xf32>
    %1 = vector.shape_cast %0 : vector<1x36x64xf32> to vector<36x64xf32>
    %c0_2 = arith.constant 0 : index
    %c0_3 = arith.constant 0 : index
    %2 = vector.load %arg3[%c0_2, %c0_3] : memref<4x36xf32, #tpu.memory_space<vmem>>, vector<4x36xf32>
    %3 = arith.truncf %2 : vector<4x36xf32> to vector<4x36xbf16>
    %4 = arith.truncf %1 : vector<36x64xf32> to vector<36x64xbf16>
    %cst = arith.constant dense<0.000000e+00> : vector<4x64xf32>
    %5 = tpu.matmul %3, %4, %cst {dimension_numbers = #tpu.dot_dimension_numbers<[1], [0], [0], [1], [0, 0, 1, 1], [], []>} : vector<4x36xbf16>, vector<36x64xbf16>, vector<4x64xf32> -> vector<4x64xf32>
    %c0_4 = arith.constant 0 : index
    %c0_5 = arith.constant 0 : index
    %6 = vector.load %arg4[%c0_4, %c0_5] : memref<4x1xf32, #tpu.memory_space<vmem>>, vector<4x1xf32>
    %7 = vector.broadcast %6 : vector<4x1xf32> to vector<4x64xf32>
    %8 = arith.addf %5, %7 : vector<4x64xf32>
    %c0_6 = arith.constant 0 : index
    %c0_7 = arith.constant 0 : index
    %c0_8 = arith.constant 0 : index
    %9 = vector.load %arg5[%c0_6, %c0_7, %c0_8] : memref<1x4x64xf32, #tpu.memory_space<vmem>>, vector<1x4x64xf32>
    %10 = vector.shape_cast %9 : vector<1x4x64xf32> to vector<4x64xf32>
    %11 = vector.shape_cast %8 : vector<4x64xf32> to vector<1x4x64xf32>
    tpu.vector_store %arg5[%c0_6, %c0_7, %c0_8], %11 {strides = array<i32>} : memref<1x4x64xf32, #tpu.memory_space<vmem>>, vector<1x4x64xf32>,
    return
  }
  func.func @transform_0(%arg0: i32, %arg1: i32) -> (i32, i32, i32) {
    %c0_i32 = arith.constant 0 : i32
    %c0_i32_0 = arith.constant 0 : i32
    return %arg0, %c0_i32, %arg1 : i32, i32, i32
  }
  func.func @transform_1(%arg0: i32, %arg1: i32) -> (i32, i32) {
    %c0_i32 = arith.constant 0 : i32
    %c0_i32_0 = arith.constant 0 : i32
    %c0_i32_1 = arith.constant 0 : i32
    return %c0_i32, %c0_i32_0 : i32, i32
  }
  func.func @transform_2(%arg0: i32, %arg1: i32) -> (i32, i32) {
    %c0_i32 = arith.constant 0 : i32
    %c0_i32_0 = arith.constant 0 : i32
    %c0_i32_1 = arith.constant 0 : i32
    return %c0_i32, %c0_i32_0 : i32, i32
  }
  func.func @transform_3(%arg0: i32, %arg1: i32) -> (i32, i32, i32) {
    %c0_i32 = arith.constant 0 : i32
    %c0_i32_0 = arith.constant 0 : i32
    return %arg0, %c0_i32, %arg1 : i32, i32, i32
  }
}

</mosaic_0001>

<llo_original>
// kernel: tpu_custom_call.1
$region0: #{tpu_custom_call.1}
  #allocation0 [shape = 'u32[]', space=smem, size = 0x4, offset = 0x4, fixed_abs, tag = 'smem constant byte address 0x4 - core index']
  #allocation1 [shape = 'u32[144,128]{1,0:T(1,128)}', space=vmem, size = 0x12000, scoped, tag = 'internal scratch']
  %s0 = inlined_call_operand.vmem [shape: f32[2,36,64], index: 0, kind: input, shape index: {}]
  %s1 = inlined_call_operand.vmem [shape: f32[4,36], index: 1, kind: input, shape index: {}]
  %s2 = inlined_call_operand.vmem [shape: f32[4,1], index: 2, kind: input, shape index: {}]
  %s3 = inlined_call_operand.hbm [shape: f32[2,4,64], index: 3, kind: output, shape index: {}]
  %s4 = sld [smem:[#allocation0]]
  $region45: #{tpu_custom_call.1} parent=0
    _
  %s6 = ssub.s32 1, %s4
  %s7 = scalar_select 0, %s6, %s4
  $region1: #{tpu_custom_call.1} parent=0
    #allocation2 [shape = 'u8[4096]{0}', space=vmem, size = 0x1000, scoped, tag = 'output window, operand 0']
    #allocation3 [shape = 's32[2]{0}', space=sflag, size = 0x8, scoped, tag = 'scoped memory for tpu_custom_call.1']
    %8 = vsyncpa [#allocation3], 0
    %s9 = scalar_lea.sflag [#allocation3], 1
    %10 = vsyncpa %s9, 0
    loop: start=0, step=1, limit=4
    $region2: #{tpu_custom_call.1} parent=1 // loop_pre_header
      _
    $region3: #{tpu_custom_call.1} parent=1 // loop_header
      %s12 = sphi 0, %s16
      %p13 = scmp.ge.s32.totalorder %s12, 4
      %s19 = sphi 0, %s31
      %s20 = sphi 0, %s27
      %s21 = sphi 0, %s19
      %s22 = sphi 0, %s20
      %s23 = sphi 0, %s21
      %s24 = sphi 0, %s22
      %s36 = sphi 0, %s38
      %s39 = sphi 0, %s36
      %s40 = sphi 0, %s39
      %s56 = sphi 0, %s40
      %s60 = sphi 0, %s60
      %s62 = sphi 0, %s60
      %s63 = sphi 0, %s62
      %s77 = sphi 0, %s63
      %s81 = sphi 0, %s81
      %s83 = sphi 0, %s81
      %s84 = sphi 0, %s83
      %s98 = sphi 0, %s84
      %s106 = sphi 0, %s108
      %s109 = sphi 0, %s106
      %s110 = sphi 0, %s109
      %s126 = sphi 0, %s110
    $region4: #{tpu_custom_call.1} parent=1 // loop_header_branch
      %15 = sbr.rel (%p13) target = $region8
    $region5: #{tpu_custom_call.1} parent=1 // loop_body
      %s17 = ssub.s32 %s12, 1
      %s18 = ssub.s32 %s12, 2
      %s25 = sadd.s32 1, %s20
      %p26 = scmp.ge.s32.totalorder %s25, 1
      %s27 = scalar_select %p26, 0, %s25
      %s28 = sadd.s32 1, %s19
      %s29 = scalar_select %p26, %s28, %s19
      %p30 = scmp.ge.s32.totalorder %s29, 2
      %s31 = scalar_select %p30, 0, %s29
      %s32 = ssub.s32 %s19, %s31
      %s33 = ssub.s32 %s20, %s27
      %s34 = sor.u32 %s32, %s33
      %p35 = scmp.eq.s32.totalorder %s34, 0
      %s37 = sadd.s32 %s36, 1
      %s38 = scalar_select %p35, %s36, %s37
      %p41 = pneg %p35
      %p42 = scmp.eq.s32.totalorder %s12, 1
      %p43 = por %p41, %p42
      %p44 = scmp.ne.s32.totalorder %s36, %s39
      %p45 = scmp.eq.s32.totalorder %s12, 0
      %p46 = por %p44, %p45
      %p47 = scmp.ne.s32.totalorder %s36, %s39
      %p48 = scmp.eq.s32.totalorder %s17, 1
      %p49 = por %p47, %p48
      %p50 = scmp.ne.s32.totalorder %s39, %s40
      %p51 = scmp.eq.s32.totalorder %s17, 0
      %p52 = por %p50, %p51
      %p53 = scmp.ne.s32.totalorder %s39, %s40
      %p54 = scmp.eq.s32.totalorder %s18, 1
      %p55 = por %p53, %p54
      %p57 = scmp.ne.s32.totalorder %s40, %s56
      %p58 = scmp.eq.s32.totalorder %s18, 0
      %p59 = por %p57, %p58
      %s61 = sadd.s32 %s60, 1
      %p64 = scmp.eq.s32.totalorder %s12, 1
      %p65 = scmp.ne.s32.totalorder %s60, %s62
      %p66 = scmp.eq.s32.totalorder %s12, 0
      %p67 = por %p65, %p66
      %p68 = scmp.ne.s32.totalorder %s60, %s62
      %p69 = scmp.eq.s32.totalorder %s17, 1
      %p70 = por %p68, %p69
      %p71 = scmp.ne.s32.totalorder %s62, %s63
      %p72 = scmp.eq.s32.totalorder %s17, 0
      %p73 = por %p71, %p72
      %p74 = scmp.ne.s32.totalorder %s62, %s63
      %p75 = scmp.eq.s32.totalorder %s18, 1
      %p76 = por %p74, %p75
      %p78 = scmp.ne.s32.totalorder %s63, %s77
      %p79 = scmp.eq.s32.totalorder %s18, 0
      %p80 = por %p78, %p79
      %s82 = sadd.s32 %s81, 1
      %p85 = scmp.eq.s32.totalorder %s12, 1
      %p86 = scmp.ne.s32.totalorder %s81, %s83
      %p87 = scmp.eq.s32.totalorder %s12, 0
      %p88 = por %p86, %p87
      %p89 = scmp.ne.s32.totalorder %s81, %s83
      %p90 = scmp.eq.s32.totalorder %s17, 1
      %p91 = por %p89, %p90
      %p92 = scmp.ne.s32.totalorder %s83, %s84
      %p93 = scmp.eq.s32.totalorder %s17, 0
      %p94 = por %p92, %p93
      %p95 = scmp.ne.s32.totalorder %s83, %s84
      %p96 = scmp.eq.s32.totalorder %s18, 1
      %p97 = por %p95, %p96
      %p99 = scmp.ne.s32.totalorder %s84, %s98
      %p100 = scmp.eq.s32.totalorder %s18, 0
      %p101 = por %p99, %p100
      %s102 = ssub.s32 %s19, %s31
      %s103 = ssub.s32 %s20, %s27
      %s104 = sor.u32 %s102, %s103
      %p105 = scmp.eq.s32.totalorder %s104, 0
      %s107 = sadd.s32 %s106, 1
      %s108 = scalar_select %p105, %s106, %s107
      %p111 = pneg %p105
      %p112 = scmp.eq.s32.totalorder %s12, 1
      %p113 = por %p111, %p112
      %p114 = scmp.ne.s32.totalorder %s106, %s109
      %p115 = scmp.eq.s32.totalorder %s12, 0
      %p116 = por %p114, %p115
      %p117 = scmp.ne.s32.totalorder %s106, %s109
      %p118 = scmp.eq.s32.totalorder %s17, 1
      %p119 = por %p117, %p118
      %p120 = scmp.ne.s32.totalorder %s109, %s110
      %p121 = scmp.eq.s32.totalorder %s17, 0
      %p122 = por %p120, %p121
      %p123 = scmp.ne.s32.totalorder %s109, %s110
      %p124 = scmp.eq.s32.totalorder %s18, 1
      %p125 = por %p123, %p124
      %p127 = scmp.ne.s32.totalorder %s110, %s126
      %p128 = scmp.eq.s32.totalorder %s18, 0
      %p129 = por %p127, %p128
      %p130 = scmp.le.s32.totalorder 1, %s12
      %p131 = scmp.lt.s32.totalorder %s12, 3
      %p132 = pnand %p130, %p131
      %p133 = pneg %p132
      // Predicated region
      $region9: #{tpu_custom_call.1} parent=5 // pred_check
        _
      $region10: #{tpu_custom_call.1} parent=5 // pred_check_branch
        %135 = sbr.rel (%p132) target = $region12
      $region11: #{tpu_custom_call.1} parent=5 // pred_region
        %s136 = ssub.s32 %s12, 1
        // Predicated region
        $region13: #{tpu_custom_call.1} parent=11 // pred_check
          %p137 = pneg %p73
        $region14: #{tpu_custom_call.1} parent=11 // pred_check_branch
          %139 = sbr.rel (%p137) target = $region16
        $region15: #{tpu_custom_call.1} parent=11 // pred_region
          _
        $region16: #{tpu_custom_call.1} parent=11 // pred_fallthru
          _
        // Predicated region
        $region17: #{tpu_custom_call.1} parent=11 // pred_check
          %p140 = pneg %p94
        $region18: #{tpu_custom_call.1} parent=11 // pred_check_branch
          %142 = sbr.rel (%p140) target = $region20
        $region19: #{tpu_custom_call.1} parent=11 // pred_region
          _
        $region20: #{tpu_custom_call.1} parent=11 // pred_fallthru
          _
      $region12: #{tpu_custom_call.1} parent=5 // pred_fallthru
        _
      %p143 = scmp.lt.s32.totalorder %s12, 2
      // Predicated region
      $region21: #{tpu_custom_call.1} parent=5 // pred_check
        %p144 = pneg %p143
      $region22: #{tpu_custom_call.1} parent=5 // pred_check_branch
        %146 = sbr.rel (%p144) target = $region24
      $region23: #{tpu_custom_call.1} parent=5 // pred_region
        // Predicated region
        $region25: #{tpu_custom_call.1} parent=23 // pred_check
          %p147 = pneg %p46
        $region26: #{tpu_custom_call.1} parent=23 // pred_check_branch
          %149 = sbr.rel (%p147) target = $region28
        $region27: #{tpu_custom_call.1} parent=23 // pred_region
          %p150 = scmp.lt.s32.totalorder %s19, 1
          %s151 = scalar_select %p150, %s19, 1
          %p152 = scmp.lt.s32.totalorder %s20, 0
          %s153 = scalar_select %p152, %s20, 0
          %s154 = smul.addr %s151, 5
          %s155 = sadd.s32 %s153, %s154
          %s156 = smul.addr %s155, 8
          %s157 = scalar_lea.vmem %s0, %s156
        $region28: #{tpu_custom_call.1} parent=23 // pred_fallthru
          _
      $region24: #{tpu_custom_call.1} parent=5 // pred_fallthru
        _
      %p158 = scmp.le.s32.totalorder 1, %s12
      %p159 = scmp.lt.s32.totalorder %s12, 3
      %p160 = pnand %p158, %p159
      %p161 = pneg %p160
      // Predicated region
      $region29: #{tpu_custom_call.1} parent=5 // pred_check
        _
      $region30: #{tpu_custom_call.1} parent=5 // pred_check_branch
        %163 = sbr.rel (%p160) target = $region32
      $region31: #{tpu_custom_call.1} parent=5 // pred_region
        %s164 = ssub.s32 %s12, 1
        %p165 = scmp.lt.s32.totalorder %s21, 1
        %s166 = scalar_select %p165, %s21, 1
        %p167 = scmp.lt.s32.totalorder %s22, 0
        %s168 = scalar_select %p167, %s22, 0
        %s169 = smul.addr %s166, 5
        %s170 = sadd.s32 %s168, %s169
        %s171 = smul.addr %s170, 8
        %s172 = scalar_lea.vmem %s0, %s171
        %p173 = pneg %p52
        %p174 = pneg %p49
        %p175 = pneg %p73
        %p176 = pneg %p70
        %p177 = pneg %p94
        %p178 = pneg %p91
        %p179 = pneg %p122
        %p180 = pneg %p119
        %s181 = sand.u32 %s109, 1
        %s182 = scalar_lea.sflag [#allocation3], %s181
        %s183 = sand.u32 %s109, 1
        %s184 = smul.addr %s183, 4
        %s185 = scalar_lea.vmem [#allocation2], %s184
        %p186 = scmp.lt.s32.totalorder %s21, 1
        %s187 = scalar_select %p186, %s21, 1
        %p188 = scmp.lt.s32.totalorder %s22, 0
        %s189 = scalar_select %p188, %s22, 0
        %s190 = smul.addr %s187, 5
        %s191 = sadd.s32 %s189, %s190
        %s192 = smul.addr %s191, 8
        %s193 = scalar_lea.vmem %s0, %s192
        %v195 = vld [vmem:[%s193] sm:$0xff]
        %v196 = vld [vmem:[%s193 + $0x8] sm:$0xff]
        %v197 = vld [vmem:[%s193 + $0x10] sm:$0xff]
        %v198 = vld [vmem:[%s193 + $0x18] sm:$0xff]
        %v199 = vld [vmem:[%s193 + $0x20] sm:$0xf]
        %v200 = vld [vmem:[%s1] sm:$0xf]
        %v201 = vpack.c.bf16 %v200, %v200
        %v202 = vpack.c.bf16 %v196, %v195
        %v203 = vpack.c.bf16 %v198, %v197
        %v204 = vpack.c.bf16 %v199, %v199
        %v205 = vld [vmem:[%s2] sm:$0xf]
        %207 = vset.pattern.permute.xlu0 0
        %208 = vperm.xlu0 %207, %v205
        %v209 = vpop.permute.xlu0 %208
        %vm211 = vcmask 293888
        %v213 = vsel %vm211, %v201, 0
        %vm215 = vcmask 1041408
        %v217 = vsel %vm215, %v204, 0
        %219 = vmatprep.subr.bf16.mxu0 0
        %220 = vmatpush1.bf16.msra.mxu0 %v202
        %221 = vmatprep.subr.bf16.mxu0 0
        %222 = vmatpush1.bf16.msra.mxu0 %v203
        %223 = vmatprep.subr.bf16.mxu0 0
        %224 = vmatpush1.bf16.msra.mxu0 %v217
        %225 = vmatprep.subr.bf16.mxu0 0
        %226 = vmatpush1.bf16.msra.mxu0 0
        %227 = vmatprep.subr.bf16.mxu0 0
        %228 = vmatpush1.bf16.msra.mxu0 0
        %229 = vmatprep.subr.bf16.mxu0 0
        %230 = vmatpush1.bf16.msra.mxu0 0
        %231 = vmatprep.subr.bf16.mxu0 0
        %232 = vmatpush1.bf16.msra.mxu0 0
        %233 = vmatprep.subr.bf16.mxu0 0
        %234 = vmatpush1.bf16.msra.mxu0 0
        %235 = vmatprep.subr.bf16.mxu0 0
        %236 = vmatpush1.bf16.msra.mxu0 0
        %237 = vmatprep.subr.bf16.mxu0 0
        %238 = vmatpush1.bf16.msra.mxu0 0
        %239 = vmatprep.subr.bf16.mxu0 0
        %240 = vmatpush1.bf16.msra.mxu0 0
        %241 = vmatprep.subr.bf16.mxu0 0
        %242 = vmatpush1.bf16.msra.mxu0 0
        %243 = vmatprep.subr.bf16.mxu0 0
        %244 = vmatpush1.bf16.msra.mxu0 0
        %245 = vmatprep.subr.bf16.mxu0 0
        %246 = vmatpush1.bf16.msra.mxu0 0
        %247 = vmatprep.subr.bf16.mxu0 0
        %248 = vmatpush1.bf16.msra.mxu0 0
        %249 = vmatprep.subr.bf16.mxu0 0
        %250 = vmatpush1.bf16.msra.mxu0 0
        %251 = vmatprep.mubr.bf16.mxu0 0
        %252 = vmatmul.mubr.bf16.gmra.mrb[0].mxu0 %v213
        %v253 = vpop.f32.mrb[0].mxu0
        %v254 = vadd.f32 %v209, %v253
        %v255 = vpop.f32.mrb[0].mxu0
        %v256 = vpop.f32.mrb[0].mxu0
        %v257 = vpop.f32.mrb[0].mxu0
        %258 = vdwg.mxu0
        %vm259 = vcmask 519168
        %260 = vst.msk [vmem:[%s185] sm:$0xf] %vm259, %v254
        %s261 = sand.u32 %s109, 1
        %s262 = scalar_lea.sflag [#allocation3], %s261
        %s263 = sand.u32 %s109, 1
        %s264 = smul.addr %s263, 4
        %s265 = scalar_lea.vmem [#allocation2], %s264
        // Predicated region
        $region33: #{tpu_custom_call.1} parent=31 // pred_check
          %p266 = pneg %p119
        $region34: #{tpu_custom_call.1} parent=31 // pred_check_branch
          %268 = sbr.rel (%p266) target = $region36
        $region35: #{tpu_custom_call.1} parent=31 // pred_region
          %s270 = ssub.s32 64, 64
          %271 = vsyncadd %s262, %s270
          %s272 = sadd.s32 %s22, %s21
          %s273 = smul.addr %s272, 64
          %s274 = scalar_lea.hbm %s3, %s273
          %s276 = sshll.u32 %s265, 4
          %s277 = int_to_ptr.vmem [resolvable:$true] %s276
          %279 = dma.vmem_to_hbm [thread:$0]  %s277, 64, %s274, %s262
        $region36: #{tpu_custom_call.1} parent=31 // pred_fallthru
          _
      $region32: #{tpu_custom_call.1} parent=5 // pred_fallthru
        _
      %p280 = scmp.le.s32.totalorder 2, %s12
      // Predicated region
      $region37: #{tpu_custom_call.1} parent=5 // pred_check
        %p281 = pneg %p280
      $region38: #{tpu_custom_call.1} parent=5 // pred_check_branch
        %283 = sbr.rel (%p281) target = $region40
      $region39: #{tpu_custom_call.1} parent=5 // pred_region
        %s284 = ssub.s32 %s12, 2
        // Predicated region
        $region41: #{tpu_custom_call.1} parent=39 // pred_check
          %p285 = pneg %p125
        $region42: #{tpu_custom_call.1} parent=39 // pred_check_branch
          %287 = sbr.rel (%p285) target = $region44
        $region43: #{tpu_custom_call.1} parent=39 // pred_region
          %s288 = sand.u32 %s110, 1
          %s289 = scalar_lea.sflag [#allocation3], %s288
          %s290 = sand.u32 %s110, 1
          %s291 = smul.addr %s290, 4
          %s292 = scalar_lea.vmem [#allocation2], %s291
          %293 = dma.done %s289, 64
        $region44: #{tpu_custom_call.1} parent=39 // pred_fallthru
          _
      $region40: #{tpu_custom_call.1} parent=5 // pred_fallthru
        _
    $region6: #{tpu_custom_call.1} parent=1 // loop_footer
      %s16 = sadd.s32 1, %s12
    $region7: #{tpu_custom_call.1} parent=1 // loop_footer_branch
      %11 = sbr.rel target = $region3
    $region8: #{tpu_custom_call.1} parent=1 // loop_exit
      _
    %294 = vsyncpa [#allocation3], 1
    %s295 = scalar_lea.sflag [#allocation3], 1
    %296 = vsyncpa %s295, 1

</llo_original>
